<compile_context>
chip_gen: v5e
topology: v5e:2x2
jax: 0.10.0
libtpu: 0.0.40
codegen_flags: <defaults>
</compile_context>

<pallas_src>
import functools

import jax
import jax.numpy as jnp
from jax import lax
from jax.experimental import pallas as pl
from jax.experimental.pallas import tpu as pltpu


def _round_up(x, m):
    return ((x + m - 1) // m) * m


def actor_critic_kernel(x_ref,
                        w1_ref, b1_ref, w2_ref, b2_ref,
                        wh_ref, bh_ref,          # fused/padded head weights & biases
                        wbo_ref, bbo_ref,        # padded belief_output
                        heads_ref, belief_ref,
                        *, num_actions, head_pad):
    wdt = w1_ref.dtype  # MXU operand dtype (f32, or bf16 on v6e/v7x)

    x = x_ref[...].astype(wdt)

    # fc1 + relu (bias/relu in f32)
    h1 = jnp.dot(x, w1_ref[...], preferred_element_type=jnp.float32) + b1_ref[...]
    h1 = jnp.maximum(h1, 0.0)

    # fc2 + relu -> features
    feat = (jnp.dot(h1.astype(wdt), w2_ref[...], preferred_element_type=jnp.float32)
            + b2_ref[...])
    feat = jnp.maximum(feat, 0.0)

    # One fused matmul for everything that reads `feat`.  Column layout:
    #   [ logits(num_actions) | value | term | effort | exec | 0-pad ... head_pad
    #     | belief_fc(hidden) ]
    heads_all = (jnp.dot(feat.astype(wdt), wh_ref[...],
                         preferred_element_type=jnp.float32)
                 + bh_ref[...])

    # Scalar heads: a full [tb, head_pad] (128-lane multiple) slab -> unmasked store.
    scal = heads_all[:, :head_pad]
    col = lax.broadcasted_iota(jnp.int32, scal.shape, 1)
    # Stable sigmoid / softplus (no inf intermediates), all in f32.
    e = jnp.exp(-jnp.abs(scal))
    sig = jnp.where(scal >= 0.0, 1.0 / (1.0 + e), e / (1.0 + e))
    sp = jnp.maximum(scal, 0.0) + jnp.log1p(e)
    out = jnp.where((col == num_actions + 1) | (col == num_actions + 3), sig, scal)
    out = jnp.where(col == num_actions + 2, sp, out)
    heads_ref[...] = out

    # belief_fc columns start on a vreg boundary (lane head_pad) -> free slice.
    bf = jnp.maximum(heads_all[:, head_pad:], 0.0)
    belief_ref[...] = (jnp.dot(bf.astype(wdt), wbo_ref[...],
                               preferred_element_type=jnp.float32)
                       + bbo_ref[...])


def _tpu_generation():
    """Best-effort TPU generation detection (7 -> v7x, 6 -> v6e, ...)."""
    try:
        kind = jax.devices()[0].device_kind.lower()
        for v in (7, 6, 5, 4):
            if f"v{v}" in kind:
                return v
    except Exception:
        pass
    return 6


def _default_tb(B, *, max_tile=2048, prefer_even_steps=False):
    """Pick the batch tile.  This kernel is overhead-bound, so minimize grid
    steps: a single step when the batch fits (v5e/v6e); on v7x prefer an even
    step count so the 'parallel' axis balances across both TensorCores."""
    cands = [t for t in range(8, min(B, max_tile) + 1, 8) if B % t == 0]
    if not cands:
        return B  # tiny batch: single full-array step
    if prefer_even_steps:
        even = [t for t in cands if (B // t) % 2 == 0]
        if even:
            return max(even)
    if B <= max_tile:
        return B
    return max(cands)


def prepare_fused_params(params, *, weight_dtype=jnp.float32):
    """Build the fused / zero-padded operand list ONCE (hoisted out of the
    per-call forward path).  Weights may be cast to bf16 (v6e/v7x); biases
    stay f32 (added to the f32 accumulator)."""
    d_in, hidden = params["w1"].shape
    num_actions = params["wa"].shape[1]
    na4 = num_actions + 4
    head_pad = _round_up(na4, 128)
    belief_pad = _round_up(d_in, 128)

    zpad_w = jnp.zeros((hidden, head_pad - na4), jnp.float32)
    zpad_b = jnp.zeros((1, head_pad - na4), jnp.float32)
    wh = jnp.concatenate([params["wa"], params["wv"], params["wt"],
                          params["we"], params["wx"], zpad_w, params["wbf"]], axis=1)
    bh = jnp.concatenate([params["ba"], params["bv"], params["bt"],
                          params["be"], params["bx"], zpad_b, params["bbf"]], axis=1)

    wbo = jnp.concatenate(
        [params["wbo"], jnp.zeros((hidden, belief_pad - d_in), jnp.float32)], axis=1)
    bbo = jnp.concatenate(
        [params["bbo"], jnp.zeros((1, belief_pad - d_in), jnp.float32)], axis=1)

    wc = lambda w: w.astype(weight_dtype)
    fused = [wc(params["w1"]), params["b1"],
             wc(params["w2"]), params["b2"],
             wc(wh), bh,
             wc(wbo), bbo]
    meta = dict(num_actions=num_actions, d_in=d_in, hidden=hidden,
                head_pad=head_pad, belief_pad=belief_pad)
    return fused, meta


def actor_critic_forward(x, fused, meta, *, tb=None):
    """Whole forward pass in a single Pallas kernel, tiled over batch."""
    B, d_in = x.shape
    assert d_in == meta["d_in"], (d_in, meta["d_in"])
    num_actions = meta["num_actions"]
    head_pad = meta["head_pad"]
    belief_pad = meta["belief_pad"]

    if tb is None:
        tb = _default_tb(B, prefer_even_steps=(_tpu_generation() >= 7))
    assert B % tb == 0, (B, tb)
    if tb < B:
        # (8,128) constraint: a partial batch tile must be a sublane multiple.
        assert tb % 8 == 0, "batch tile must be a multiple of 8 when tb < B"

    grid = (B // tb,)

    def rep_spec(p):
        # Weights/biases: full array, same block every grid step (stays resident).
        # TODO(synk): for very large hidden sizes add pipeline_mode=pl.Buffered(1)
        # so resident weights are not double-buffered (irrelevant at hidden<=64).
        return pl.BlockSpec(p.shape, lambda i: (0, 0))

    in_specs = [pl.BlockSpec((tb, d_in), lambda i: (i, 0))]
    in_specs += [rep_spec(p) for p in fused]

    out_shape = (
        jax.ShapeDtypeStruct((B, head_pad), jnp.float32),    # padded scalar heads
        jax.ShapeDtypeStruct((B, belief_pad), jnp.float32),  # padded belief
    )
    out_specs = (
        pl.BlockSpec((tb, head_pad), lambda i: (i, 0)),
        pl.BlockSpec((tb, belief_pad), lambda i: (i, 0)),
    )

    heads, belief = pl.pallas_call(
        functools.partial(actor_critic_kernel,
                          num_actions=num_actions, head_pad=head_pad),
        out_shape=out_shape,
        grid=grid,
        in_specs=in_specs,
        out_specs=out_specs,
        # No vmem_limit_bytes: the default scoped limit is ample for this tiny
        # model and never over-requests v7x's 64 MiB physical VMEM.
        compiler_params=pltpu.CompilerParams(
            dimension_semantics=("parallel",),
        ),
    )(x, *fused)

    logits = heads[:, :num_actions]
    value = heads[:, num_actions:num_actions + 1]
    term = heads[:, num_actions + 1:num_actions + 2]
    effort = heads[:, num_actions + 2:num_actions + 3]
    exec_p = heads[:, num_actions + 3:num_actions + 4]
    belief_out = belief[:, :d_in]
    return logits, value, term, effort, exec_p, belief_out


def init_params(key, input_dim, hidden_dim, num_actions):
    """PyTorch-style uniform(-1/sqrt(fan_in), 1/sqrt(fan_in)); weights [in, out]."""
    def linear(k, fan_in, fan_out):
        kw, kb = jax.random.split(k)
        bound = 1.0 / jnp.sqrt(jnp.float32(fan_in))
        w = jax.random.uniform(kw, (fan_in, fan_out), jnp.float32, -bound, bound)
        b = jax.random.uniform(kb, (1, fan_out), jnp.float32, -bound, bound)
        return w, b

    keys = jax.random.split(key, 9)
    p = {}
    p["w1"], p["b1"] = linear(keys[0], input_dim, hidden_dim)
    p["w2"], p["b2"] = linear(keys[1], hidden_dim, hidden_dim)
    p["wa"], p["ba"] = linear(keys[2], hidden_dim, num_actions)
    p["wv"], p["bv"] = linear(keys[3], hidden_dim, 1)
    p["wt"], p["bt"] = linear(keys[4], hidden_dim, 1)
    p["we"], p["be"] = linear(keys[5], hidden_dim, 1)
    p["wx"], p["bx"] = linear(keys[6], hidden_dim, 1)
    p["wbf"], p["bbf"] = linear(keys[7], hidden_dim, hidden_dim)
    p["wbo"], p["bbo"] = linear(keys[8], hidden_dim, input_dim)
    return p


def reference_forward(x, p, *, compute_dtype=jnp.float32):
    """Pure-JAX reference matching the PyTorch forward semantics.  With
    compute_dtype=bf16 it mimics the reduced-precision kernel path exactly
    (bf16 MXU operands, f32 accumulation, f32 epilogue)."""
    def mm(a, w):
        return jnp.dot(a.astype(compute_dtype), w.astype(compute_dtype),
                       preferred_element_type=jnp.float32)
    h1 = jax.nn.relu(mm(x, p["w1"]) + p["b1"])
    feat = jax.nn.relu(mm(h1, p["w2"]) + p["b2"])
    logits = mm(feat, p["wa"]) + p["ba"]
    value = mm(feat, p["wv"]) + p["bv"]
    term = jax.nn.sigmoid(mm(feat, p["wt"]) + p["bt"])
    effort = jax.nn.softplus(mm(feat, p["we"]) + p["be"])
    exec_p = jax.nn.sigmoid(mm(feat, p["wx"]) + p["bx"])
    bf = jax.nn.relu(mm(feat, p["wbf"]) + p["bbf"])
    belief = mm(bf, p["wbo"]) + p["bbo"]
    return logits, value, term, effort, exec_p, belief


if __name__ == "__main__":
    INPUT_DIM, HIDDEN_DIM, NUM_ACTIONS = 16, 32, 2

    key = jax.random.PRNGKey(0)
    kx, kp = jax.random.split(key)
    params = init_params(kp, INPUT_DIM, HIDDEN_DIM, NUM_ACTIONS)

    # f32 weight path: tight-tolerance check on both the single-step (tiny
    # batch) and the tiled / multi-step grid paths.
    fused_f32, meta = prepare_fused_params(params, weight_dtype=jnp.float32)
    for B in (8, 512):
        x = jax.random.normal(jax.random.fold_in(kx, B), (B, INPUT_DIM), jnp.float32)
        outs = jax.block_until_ready(actor_critic_forward(x, fused_f32, meta))
        refs = reference_forward(x, params)
        for o, r in zip(outs, refs):
            assert o.shape == r.shape, (o.shape, r.shape)
            assert jnp.allclose(o, r, atol=1e-5, rtol=1e-5), \
                float(jnp.max(jnp.abs(o - r)))

    # bf16 weight path (v6e/v7x reduced-precision): compare against a
    # reference using identical bf16 operands with f32 accumulation.
    fused_bf16, meta_bf = prepare_fused_params(params, weight_dtype=jnp.bfloat16)
    xb = jax.random.normal(jax.random.fold_in(kx, 1), (64, INPUT_DIM), jnp.float32)
    outs = jax.block_until_ready(actor_critic_forward(xb, fused_bf16, meta_bf))
    refs = reference_forward(xb, params, compute_dtype=jnp.bfloat16)
    for o, r in zip(outs, refs):
        assert o.shape == r.shape, (o.shape, r.shape)
        assert jnp.allclose(o, r, atol=2e-2, rtol=2e-2), \
            float(jnp.max(jnp.abs(o - r)))

    print("KERNEL_OK")
</pallas_src>

<mosaic_0001>
module attributes {stable_mosaic.version = 11 : i64} {
  func.func @actor_critic_kernel(%arg0: i32, %arg1: memref<8x16xf32, #tpu.memory_space<vmem>>, %arg2: memref<16x32xf32, #tpu.memory_space<vmem>>, %arg3: memref<1x32xf32, #tpu.memory_space<vmem>>, %arg4: memref<32x32xf32, #tpu.memory_space<vmem>>, %arg5: memref<1x32xf32, #tpu.memory_space<vmem>>, %arg6: memref<32x160xf32, #tpu.memory_space<vmem>>, %arg7: memref<1x160xf32, #tpu.memory_space<vmem>>, %arg8: memref<32x128xf32, #tpu.memory_space<vmem>>, %arg9: memref<1x128xf32, #tpu.memory_space<vmem>>, %arg10: memref<8x128xf32, #tpu.memory_space<vmem>>, %arg11: memref<8x128xf32, #tpu.memory_space<vmem>>) attributes {dimension_semantics = [#tpu.dimension_semantics<parallel>], iteration_bounds = array<i64: 1>, scalar_prefetch = 0 : i64, scratch_operands = 0 : i64, tpu.core_type = #tpu.core_type<tc>, window_params = [{transform_indices = @transform_0, window_bounds = array<i64: 8, 16>}, {pipeline_mode = #tpu.pipeline_mode<synchronous>, transform_indices = @transform_1, window_bounds = array<i64: 16, 32>}, {pipeline_mode = #tpu.pipeline_mode<synchronous>, transform_indices = @transform_2, window_bounds = array<i64: 1, 32>}, {pipeline_mode = #tpu.pipeline_mode<synchronous>, transform_indices = @transform_3, window_bounds = array<i64: 32, 32>}, {pipeline_mode = #tpu.pipeline_mode<synchronous>, transform_indices = @transform_4, window_bounds = array<i64: 1, 32>}, {pipeline_mode = #tpu.pipeline_mode<synchronous>, transform_indices = @transform_5, window_bounds = array<i64: 32, 160>}, {pipeline_mode = #tpu.pipeline_mode<synchronous>, transform_indices = @transform_6, window_bounds = array<i64: 1, 160>}, {pipeline_mode = #tpu.pipeline_mode<synchronous>, transform_indices = @transform_7, window_bounds = array<i64: 32, 128>}, {pipeline_mode = #tpu.pipeline_mode<synchronous>, transform_indices = @transform_8, window_bounds = array<i64: 1, 128>}, {transform_indices = @transform_9, window_bounds = array<i64: 8, 128>}, {transform_indices = @transform_10, window_bounds = array<i64: 8, 128>}]} {
    %c0 = arith.constant 0 : index
    %c0_0 = arith.constant 0 : index
    %0 = vector.load %arg1[%c0, %c0_0] : memref<8x16xf32, #tpu.memory_space<vmem>>, vector<8x16xf32>
    %c0_1 = arith.constant 0 : index
    %c0_2 = arith.constant 0 : index
    %1 = vector.load %arg2[%c0_1, %c0_2] : memref<16x32xf32, #tpu.memory_space<vmem>>, vector<16x32xf32>
    %cst = arith.constant dense<0.000000e+00> : vector<8x32xf32>
    %2 = tpu.matmul %0, %1, %cst {dimension_numbers = #tpu.dot_dimension_numbers<[1], [0], [0], [1], [0, 0, 1, 1], [], []>} : vector<8x16xf32>, vector<16x32xf32>, vector<8x32xf32> -> vector<8x32xf32>
    %c0_3 = arith.constant 0 : index
    %c0_4 = arith.constant 0 : index
    %3 = vector.load %arg3[%c0_3, %c0_4] : memref<1x32xf32, #tpu.memory_space<vmem>>, vector<1x32xf32>
    %4 = vector.broadcast %3 : vector<1x32xf32> to vector<8x32xf32>
    %5 = arith.addf %2, %4 : vector<8x32xf32>
    %cst_5 = arith.constant 0.000000e+00 : f32
    %6 = vector.broadcast %cst_5 : f32 to vector<8x32xf32>
    %7 = arith.maximumf %5, %6 : vector<8x32xf32>
    %c0_6 = arith.constant 0 : index
    %c0_7 = arith.constant 0 : index
    %8 = vector.load %arg4[%c0_6, %c0_7] : memref<32x32xf32, #tpu.memory_space<vmem>>, vector<32x32xf32>
    %cst_8 = arith.constant dense<0.000000e+00> : vector<8x32xf32>
    %9 = tpu.matmul %7, %8, %cst_8 {dimension_numbers = #tpu.dot_dimension_numbers<[1], [0], [0], [1], [0, 0, 1, 1], [], []>} : vector<8x32xf32>, vector<32x32xf32>, vector<8x32xf32> -> vector<8x32xf32>
    %c0_9 = arith.constant 0 : index
    %c0_10 = arith.constant 0 : index
    %10 = vector.load %arg5[%c0_9, %c0_10] : memref<1x32xf32, #tpu.memory_space<vmem>>, vector<1x32xf32>
    %11 = vector.broadcast %10 : vector<1x32xf32> to vector<8x32xf32>
    %12 = arith.addf %9, %11 : vector<8x32xf32>
    %cst_11 = arith.constant 0.000000e+00 : f32
    %13 = vector.broadcast %cst_11 : f32 to vector<8x32xf32>
    %14 = arith.maximumf %12, %13 : vector<8x32xf32>
    %c0_12 = arith.constant 0 : index
    %c0_13 = arith.constant 0 : index
    %15 = vector.load %arg6[%c0_12, %c0_13] : memref<32x160xf32, #tpu.memory_space<vmem>>, vector<32x160xf32>
    %cst_14 = arith.constant dense<0.000000e+00> : vector<8x160xf32>
    %16 = tpu.matmul %14, %15, %cst_14 {dimension_numbers = #tpu.dot_dimension_numbers<[1], [0], [0], [1], [0, 0, 1, 1], [], []>} : vector<8x32xf32>, vector<32x160xf32>, vector<8x160xf32> -> vector<8x160xf32>
    %c0_15 = arith.constant 0 : index
    %c0_16 = arith.constant 0 : index
    %17 = vector.load %arg7[%c0_15, %c0_16] : memref<1x160xf32, #tpu.memory_space<vmem>>, vector<1x160xf32>
    %18 = vector.broadcast %17 : vector<1x160xf32> to vector<8x160xf32>
    %19 = arith.addf %16, %18 : vector<8x160xf32>
    %20 = vector.extract_strided_slice %19 {offsets = [0, 0], sizes = [8, 128], strides = [1, 1]} : vector<8x160xf32> to vector<8x128xf32>
    %21 = tpu.iota {dimensions = array<i32: 1>} : vector<8x128xi32>
    %22 = math.absf %20 : vector<8x128xf32>
    %cst_17 = arith.constant 0.000000e+00 : f32
    %23 = vector.broadcast %cst_17 : f32 to vector<8x128xf32>
    %24 = arith.subf %23, %22 : vector<8x128xf32>
    %25 = math.exp %24 : vector<8x128xf32>
    %cst_18 = arith.constant 0.000000e+00 : f32
    %26 = vector.broadcast %cst_18 : f32 to vector<8x128xf32>
    %27 = arith.cmpf oge, %20, %26 : vector<8x128xf32>
    %cst_19 = arith.constant 1.000000e+00 : f32
    %28 = vector.broadcast %cst_19 : f32 to vector<8x128xf32>
    %29 = arith.addf %28, %25 : vector<8x128xf32>
    %cst_20 = arith.constant 1.000000e+00 : f32
    %30 = vector.broadcast %cst_20 : f32 to vector<8x128xf32>
    %31 = arith.divf %30, %29 : vector<8x128xf32>
    %cst_21 = arith.constant 1.000000e+00 : f32
    %32 = vector.broadcast %cst_21 : f32 to vector<8x128xf32>
    %33 = arith.addf %32, %25 : vector<8x128xf32>
    %34 = arith.divf %25, %33 : vector<8x128xf32>
    %35 = arith.select %27, %31, %34 : vector<8x128xi1>, vector<8x128xf32>
    %cst_22 = arith.constant 0.000000e+00 : f32
    %36 = vector.broadcast %cst_22 : f32 to vector<8x128xf32>
    %37 = arith.maximumf %20, %36 : vector<8x128xf32>
    %38 = math.log1p %25 : vector<8x128xf32>
    %39 = arith.addf %37, %38 : vector<8x128xf32>
    %c3_i32 = arith.constant 3 : i32
    %40 = vector.broadcast %c3_i32 : i32 to vector<8x128xi32>
    %41 = arith.cmpi eq, %21, %40 : vector<8x128xi32>
    %c5_i32 = arith.constant 5 : i32
    %42 = vector.broadcast %c5_i32 : i32 to vector<8x128xi32>
    %43 = arith.cmpi eq, %21, %42 : vector<8x128xi32>
    %44 = arith.ori %41, %43 : vector<8x128xi1>
    %45 = arith.select %44, %35, %20 : vector<8x128xi1>, vector<8x128xf32>
    %c4_i32 = arith.constant 4 : i32
    %46 = vector.broadcast %c4_i32 : i32 to vector<8x128xi32>
    %47 = arith.cmpi eq, %21, %46 : vector<8x128xi32>
    %48 = arith.select %47, %39, %45 : vector<8x128xi1>, vector<8x128xf32>
    %c0_23 = arith.constant 0 : index
    %c0_24 = arith.constant 0 : index
    %49 = vector.load %arg10[%c0_23, %c0_24] : memref<8x128xf32, #tpu.memory_space<vmem>>, vector<8x128xf32>
    tpu.vector_store %arg10[%c0_23, %c0_24], %48 {strides = array<i32>} : memref<8x128xf32, #tpu.memory_space<vmem>>, vector<8x128xf32>,
    %50 = vector.extract_strided_slice %19 {offsets = [0, 128], sizes = [8, 32], strides = [1, 1]} : vector<8x160xf32> to vector<8x32xf32>
    %cst_25 = arith.constant 0.000000e+00 : f32
    %51 = vector.broadcast %cst_25 : f32 to vector<8x32xf32>
    %52 = arith.maximumf %50, %51 : vector<8x32xf32>
    %c0_26 = arith.constant 0 : index
    %c0_27 = arith.constant 0 : index
    %53 = vector.load %arg8[%c0_26, %c0_27] : memref<32x128xf32, #tpu.memory_space<vmem>>, vector<32x128xf32>
    %cst_28 = arith.constant dense<0.000000e+00> : vector<8x128xf32>
    %54 = tpu.matmul %52, %53, %cst_28 {dimension_numbers = #tpu.dot_dimension_numbers<[1], [0], [0], [1], [0, 0, 1, 1], [], []>} : vector<8x32xf32>, vector<32x128xf32>, vector<8x128xf32> -> vector<8x128xf32>
    %c0_29 = arith.constant 0 : index
    %c0_30 = arith.constant 0 : index
    %55 = vector.load %arg9[%c0_29, %c0_30] : memref<1x128xf32, #tpu.memory_space<vmem>>, vector<1x128xf32>
    %56 = vector.broadcast %55 : vector<1x128xf32> to vector<8x128xf32>
    %57 = arith.addf %54, %56 : vector<8x128xf32>
    %c0_31 = arith.constant 0 : index
    %c0_32 = arith.constant 0 : index
    %58 = vector.load %arg11[%c0_31, %c0_32] : memref<8x128xf32, #tpu.memory_space<vmem>>, vector<8x128xf32>
    tpu.vector_store %arg11[%c0_31, %c0_32], %57 {strides = array<i32>} : memref<8x128xf32, #tpu.memory_space<vmem>>, vector<8x128xf32>,
    return
  }
  func.func @transform_0(%arg0: i32) -> (i32, i32) {
    %c0_i32 = arith.constant 0 : i32
    %c0_i32_0 = arith.constant 0 : i32
    return %arg0, %c0_i32 : i32, i32
  }
  func.func @transform_1(%arg0: i32) -> (i32, i32) {
    %c0_i32 = arith.constant 0 : i32
    %c0_i32_0 = arith.constant 0 : i32
    %c0_i32_1 = arith.constant 0 : i32
    return %c0_i32, %c0_i32_0 : i32, i32
  }
  func.func @transform_2(%arg0: i32) -> (i32, i32) {
    %c0_i32 = arith.constant 0 : i32
    %c0_i32_0 = arith.constant 0 : i32
    %c0_i32_1 = arith.constant 0 : i32
    return %c0_i32, %c0_i32_0 : i32, i32
  }
  func.func @transform_3(%arg0: i32) -> (i32, i32) {
    %c0_i32 = arith.constant 0 : i32
    %c0_i32_0 = arith.constant 0 : i32
    %c0_i32_1 = arith.constant 0 : i32
    return %c0_i32, %c0_i32_0 : i32, i32
  }
  func.func @transform_4(%arg0: i32) -> (i32, i32) {
    %c0_i32 = arith.constant 0 : i32
    %c0_i32_0 = arith.constant 0 : i32
    %c0_i32_1 = arith.constant 0 : i32
    return %c0_i32, %c0_i32_0 : i32, i32
  }
  func.func @transform_5(%arg0: i32) -> (i32, i32) {
    %c0_i32 = arith.constant 0 : i32
    %c0_i32_0 = arith.constant 0 : i32
    %c0_i32_1 = arith.constant 0 : i32
    return %c0_i32, %c0_i32_0 : i32, i32
  }
  func.func @transform_6(%arg0: i32) -> (i32, i32) {
    %c0_i32 = arith.constant 0 : i32
    %c0_i32_0 = arith.constant 0 : i32
    %c0_i32_1 = arith.constant 0 : i32
    return %c0_i32, %c0_i32_0 : i32, i32
  }
  func.func @transform_7(%arg0: i32) -> (i32, i32) {
    %c0_i32 = arith.constant 0 : i32
    %c0_i32_0 = arith.constant 0 : i32
    %c0_i32_1 = arith.constant 0 : i32
    return %c0_i32, %c0_i32_0 : i32, i32
  }
  func.func @transform_8(%arg0: i32) -> (i32, i32) {
    %c0_i32 = arith.constant 0 : i32
    %c0_i32_0 = arith.constant 0 : i32
    %c0_i32_1 = arith.constant 0 : i32
    return %c0_i32, %c0_i32_0 : i32, i32
  }
  func.func @transform_9(%arg0: i32) -> (i32, i32) {
    %c0_i32 = arith.constant 0 : i32
    %c0_i32_0 = arith.constant 0 : i32
    return %arg0, %c0_i32 : i32, i32
  }
  func.func @transform_10(%arg0: i32) -> (i32, i32) {
    %c0_i32 = arith.constant 0 : i32
    %c0_i32_0 = arith.constant 0 : i32
    return %arg0, %c0_i32 : i32, i32
  }
}

</mosaic_0001>

<llo_original>
// kernel: tpu_custom_call.1
$region0: #{tpu_custom_call.1}
  #allocation0 [shape = 'u32[]', space=smem, size = 0x4, offset = 0x4, fixed_abs, tag = 'smem constant byte address 0x4 - core index']
  #allocation1 [shape = 'u32[72,128]{1,0:T(1,128)}', space=vmem, size = 0x9000, scoped, tag = 'internal scratch']
  %s0 = inlined_call_operand.hbm [shape: f32[8,16], index: 0, kind: input, shape index: {}]
  %s1 = inlined_call_operand.hbm [shape: f32[16,32], index: 1, kind: input, shape index: {}]
  %s2 = inlined_call_operand.vmem [shape: f32[1,32], index: 2, kind: input, shape index: {}]
  %s3 = inlined_call_operand.hbm [shape: f32[32,32], index: 3, kind: input, shape index: {}]
  %s4 = inlined_call_operand.hbm [shape: f32[1,32], index: 4, kind: input, shape index: {}]
  %s5 = inlined_call_operand.hbm [shape: f32[32,160], index: 5, kind: input, shape index: {}]
  %s6 = inlined_call_operand.vmem [shape: f32[1,160], index: 6, kind: input, shape index: {}]
  %s7 = inlined_call_operand.hbm [shape: f32[32,128], index: 7, kind: input, shape index: {}]
  %s8 = inlined_call_operand.vmem [shape: f32[1,128], index: 8, kind: input, shape index: {}]
  %s9 = inlined_call_operand.hbm [shape: f32[8,128], index: 9, kind: output, shape index: {0}]
  %s10 = inlined_call_operand.hbm [shape: f32[8,128], index: 10, kind: output, shape index: {1}]
  %11 = xla_tuple %s9, %s10
  %s12 = sld [smem:[#allocation0]]
  $region78: #{tpu_custom_call.1} parent=0
    _
  %s14 = ssub.s32 1, %s12
  %s15 = scalar_select 0, %s14, %s12
  $region1: #{tpu_custom_call.1} parent=0
    #allocation2 [shape = 'u8[4096]{0}', space=vmem, size = 0x1000, scoped, tag = 'input window, operand 0, single buffered']
    #allocation3 [shape = 's32[1]{0}', space=sflag, size = 0x4, scoped, tag = 'scoped memory for tpu_custom_call.1']
    #allocation4 [shape = 's32[1]{0}', space=sflag, size = 0x4, scoped, tag = 'scoped memory for tpu_custom_call.1']
    #allocation5 [shape = 'u8[8192]{0}', space=vmem, size = 0x2000, scoped, tag = 'input window, operand 1, single buffered']
    #allocation6 [shape = 's32[1]{0}', space=sflag, size = 0x4, scoped, tag = 'scoped memory for tpu_custom_call.1']
    #allocation7 [shape = 'u8[16384]{0}', space=vmem, size = 0x4000, scoped, tag = 'input window, operand 3, single buffered']
    #allocation8 [shape = 'u8[512]{0}', space=vmem, size = 0x400, scoped, tag = 'input window, operand 4, single buffered']
    #allocation9 [shape = 's32[1]{0}', space=sflag, size = 0x4, scoped, tag = 'scoped memory for tpu_custom_call.1']
    #allocation10 [shape = 'u8[32768]{0}', space=vmem, size = 0x8000, scoped, tag = 'input window, operand 5, single buffered']
    #allocation11 [shape = 'u8[16384]{0}', space=vmem, size = 0x4000, scoped, tag = 'input window, operand 7, single buffered']
    #allocation12 [shape = 's32[1]{0}', space=sflag, size = 0x4, scoped, tag = 'scoped memory for tpu_custom_call.1']
    #allocation13 [shape = 'u8[4096]{0}', space=vmem, size = 0x1000, scoped, tag = 'output window, operand 0, single buffered']
    #allocation14 [shape = 'u8[4096]{0}', space=vmem, size = 0x1000, scoped, tag = 'output window, operand 1, single buffered']
    #allocation15 [shape = 's32[1]{0}', space=sflag, size = 0x4, scoped, tag = 'scoped memory for tpu_custom_call.1']
    %16 = vsyncpa [#allocation3], 0
    %17 = vsyncpa [#allocation6], 0
    %18 = vsyncpa [#allocation9], 0
    %19 = vsyncpa [#allocation12], 0
    %20 = vsyncpa [#allocation4], 0
    %21 = vsyncpa [#allocation15], 0
    // Predicated region
    $region2: #{tpu_custom_call.1} parent=1 // pred_check
      _
    $region3: #{tpu_custom_call.1} parent=1 // pred_check_branch
      %23 = sbr.rel (0) target = $region5
    $region4: #{tpu_custom_call.1} parent=1 // pred_region
      %25 = vsyncadd [#allocation3], 0
      %s27 = sshll.u32 %s0, 4
      %s28 = int_to_ptr.hbm [resolvable:$true] %s27
      %s29 = sshll.u32 [#allocation2], 4
      %s30 = int_to_ptr.vmem [resolvable:$true] %s29
      %32 = dma.hbm_to_vmem [thread:$0]  %s28, 128, %s30, [#allocation3]
    $region5: #{tpu_custom_call.1} parent=1 // pred_fallthru
      _
    // Predicated region
    $region6: #{tpu_custom_call.1} parent=1 // pred_check
      _
    $region7: #{tpu_custom_call.1} parent=1 // pred_check_branch
      %34 = sbr.rel (0) target = $region9
    $region8: #{tpu_custom_call.1} parent=1 // pred_region
      %36 = vsyncadd [#allocation6], 0
      %s37 = sshll.u32 %s1, 4
      %s38 = int_to_ptr.hbm [resolvable:$true] %s37
      %s39 = sshll.u32 [#allocation5], 4
      %s40 = int_to_ptr.vmem [resolvable:$true] %s39
      %45 = dma.hbm_to_vmem [thread:$0]  %s38, 256, %s40, [#allocation6], 128, 128, 8
    $region9: #{tpu_custom_call.1} parent=1 // pred_fallthru
      _
    // Predicated region
    $region10: #{tpu_custom_call.1} parent=1 // pred_check
      _
    $region11: #{tpu_custom_call.1} parent=1 // pred_check_branch
      %47 = sbr.rel (0) target = $region13
    $region12: #{tpu_custom_call.1} parent=1 // pred_region
      _
    $region13: #{tpu_custom_call.1} parent=1 // pred_fallthru
      _
    // Predicated region
    $region14: #{tpu_custom_call.1} parent=1 // pred_check
      _
    $region15: #{tpu_custom_call.1} parent=1 // pred_check_branch
      %49 = sbr.rel (0) target = $region17
    $region16: #{tpu_custom_call.1} parent=1 // pred_region
      %51 = vsyncadd [#allocation6], 0
      %s52 = sshll.u32 %s3, 4
      %s53 = int_to_ptr.hbm [resolvable:$true] %s52
      %s54 = sshll.u32 [#allocation7], 4
      %s55 = int_to_ptr.vmem [resolvable:$true] %s54
      %60 = dma.hbm_to_vmem [thread:$0]  %s53, 512, %s55, [#allocation6], 128, 128, 8
    $region17: #{tpu_custom_call.1} parent=1 // pred_fallthru
      _
    // Predicated region
    $region18: #{tpu_custom_call.1} parent=1 // pred_check
      _
    $region19: #{tpu_custom_call.1} parent=1 // pred_check_branch
      %62 = sbr.rel (0) target = $region21
    $region20: #{tpu_custom_call.1} parent=1 // pred_region
      %64 = vsyncadd [#allocation9], 0
      %s66 = sshll.u32 %s4, 4
      %s67 = int_to_ptr.hbm [resolvable:$true] %s66
      %s68 = sshll.u32 [#allocation8], 4
      %s69 = int_to_ptr.vmem [resolvable:$true] %s68
      %71 = dma.hbm_to_vmem [thread:$0]  %s67, 16, %s69, [#allocation9]
    $region21: #{tpu_custom_call.1} parent=1 // pred_fallthru
      _
    // Predicated region
    $region22: #{tpu_custom_call.1} parent=1 // pred_check
      _
    $region23: #{tpu_custom_call.1} parent=1 // pred_check_branch
      %73 = sbr.rel (0) target = $region25
    $region24: #{tpu_custom_call.1} parent=1 // pred_region
      %75 = vsyncadd [#allocation9], 0
      %s76 = sshll.u32 %s5, 4
      %s77 = int_to_ptr.hbm [resolvable:$true] %s76
      %s78 = sshll.u32 [#allocation10], 4
      %s79 = int_to_ptr.vmem [resolvable:$true] %s78
      %84 = dma.hbm_to_vmem [thread:$0]  %s77, 1024, %s79, [#allocation9], 256, 256, 16
    $region25: #{tpu_custom_call.1} parent=1 // pred_fallthru
      _
    // Predicated region
    $region26: #{tpu_custom_call.1} parent=1 // pred_check
      _
    $region27: #{tpu_custom_call.1} parent=1 // pred_check_branch
      %86 = sbr.rel (0) target = $region29
    $region28: #{tpu_custom_call.1} parent=1 // pred_region
      _
    $region29: #{tpu_custom_call.1} parent=1 // pred_fallthru
      _
    // Predicated region
    $region30: #{tpu_custom_call.1} parent=1 // pred_check
      _
    $region31: #{tpu_custom_call.1} parent=1 // pred_check_branch
      %88 = sbr.rel (0) target = $region33
    $region32: #{tpu_custom_call.1} parent=1 // pred_region
      %90 = vsyncadd [#allocation12], 0
      %s91 = sshll.u32 %s7, 4
      %s92 = int_to_ptr.hbm [resolvable:$true] %s91
      %s93 = sshll.u32 [#allocation11], 4
      %s94 = int_to_ptr.vmem [resolvable:$true] %s93
      %99 = dma.hbm_to_vmem [thread:$0]  %s92, 512, %s94, [#allocation12], 128, 128, 8
    $region33: #{tpu_custom_call.1} parent=1 // pred_fallthru
      _
    // Predicated region
    $region34: #{tpu_custom_call.1} parent=1 // pred_check
      _
    $region35: #{tpu_custom_call.1} parent=1 // pred_check_branch
      %101 = sbr.rel (0) target = $region37
    $region36: #{tpu_custom_call.1} parent=1 // pred_region
      _
    $region37: #{tpu_custom_call.1} parent=1 // pred_fallthru
      _
    // Predicated region
    $region38: #{tpu_custom_call.1} parent=1 // pred_check
      _
    $region39: #{tpu_custom_call.1} parent=1 // pred_check_branch
      %103 = sbr.rel (0) target = $region41
    $region40: #{tpu_custom_call.1} parent=1 // pred_region
      %105 = dma.done [#allocation3], 128
    $region41: #{tpu_custom_call.1} parent=1 // pred_fallthru
      _
    // Predicated region
    $region42: #{tpu_custom_call.1} parent=1 // pred_check
      _
    $region43: #{tpu_custom_call.1} parent=1 // pred_check_branch
      %107 = sbr.rel (0) target = $region45
    $region44: #{tpu_custom_call.1} parent=1 // pred_region
      %109 = dma.done [#allocation6], 256
    $region45: #{tpu_custom_call.1} parent=1 // pred_fallthru
      _
    // Predicated region
    $region46: #{tpu_custom_call.1} parent=1 // pred_check
      _
    $region47: #{tpu_custom_call.1} parent=1 // pred_check_branch
      %111 = sbr.rel (0) target = $region49
    $region48: #{tpu_custom_call.1} parent=1 // pred_region
      %113 = dma.done [#allocation6], 512
    $region49: #{tpu_custom_call.1} parent=1 // pred_fallthru
      _
    // Predicated region
    $region50: #{tpu_custom_call.1} parent=1 // pred_check
      _
    $region51: #{tpu_custom_call.1} parent=1 // pred_check_branch
      %115 = sbr.rel (0) target = $region53
    $region52: #{tpu_custom_call.1} parent=1 // pred_region
      %117 = dma.done [#allocation9], 16
    $region53: #{tpu_custom_call.1} parent=1 // pred_fallthru
      _
    // Predicated region
    $region54: #{tpu_custom_call.1} parent=1 // pred_check
      _
    $region55: #{tpu_custom_call.1} parent=1 // pred_check_branch
      %119 = sbr.rel (0) target = $region57
    $region56: #{tpu_custom_call.1} parent=1 // pred_region
      %121 = dma.done [#allocation9], 1024
    $region57: #{tpu_custom_call.1} parent=1 // pred_fallthru
      _
    // Predicated region
    $region58: #{tpu_custom_call.1} parent=1 // pred_check
      _
    $region59: #{tpu_custom_call.1} parent=1 // pred_check_branch
      %123 = sbr.rel (0) target = $region61
    $region60: #{tpu_custom_call.1} parent=1 // pred_region
      %125 = dma.done [#allocation12], 512
    $region61: #{tpu_custom_call.1} parent=1 // pred_fallthru
      _
    %v126 = vld [vmem:[#allocation2] sm:$0xff]
    %v127 = vld [vmem:[#allocation5] sm:$0xff]
    %v128 = vld [vmem:[#allocation5 + $0x8] sm:$0xff]
    %v129 = vld [vmem:[%s2] sm:$0x1]
    %v131 = vperm.slane %v129, 0
    %vm133 = vcmask 130048
    %v135 = vsel %vm133, %v126, 0
    %137 = vmatpush.msra.mxu0 0.0
    %138 = vmatpush.msra.mxu0 0.0
    %139 = vmatpush.msra.mxu0 0.0
    %140 = vmatpush.msra.mxu0 0.0
    %141 = vmatpush.msra.mxu0 0.0
    %142 = vmatpush.msra.mxu0 0.0
    %143 = vmatpush.msra.mxu0 0.0
    %144 = vmatpush.msra.mxu0 0.0
    %145 = vmatpush.msra.mxu0 0.0
    %146 = vmatpush.msra.mxu0 0.0
    %147 = vmatpush.msra.mxu0 0.0
    %148 = vmatpush.msra.mxu0 0.0
    %149 = vmatpush.msra.mxu0 0.0
    %150 = vmatpush.msra.mxu0 0.0
    %151 = vmatpush.msra.mxu0 %v128
    %152 = vmatpush.msra.mxu0 %v127
    %153 = vmatmul.f32.gmra.mxu0 %v135
    %v154 = vpop.f32.mrf.mxu0
    %v155 = vadd.f32 %v131, %v154
    %156 = vdwg.mxu0
    %v157 = vmax.f32 %v155, 0.0
    %v158 = vld [vmem:[#allocation7] sm:$0xff]
    %v159 = vld [vmem:[#allocation7 + $0x8] sm:$0xff]
    %v160 = vld [vmem:[#allocation7 + $0x10] sm:$0xff]
    %v161 = vld [vmem:[#allocation7 + $0x18] sm:$0xff]
    %v162 = vld [vmem:[#allocation8] sm:$0x1]
    %v164 = vperm.slane %v162, 0
    %vm166 = vcmask 261120
    %v168 = vsel %vm166, %v157, 0
    %170 = vmatpush.msra.mxu0 0.0
    %171 = vmatpush.msra.mxu0 0.0
    %172 = vmatpush.msra.mxu0 0.0
    %173 = vmatpush.msra.mxu0 0.0
    %174 = vmatpush.msra.mxu0 0.0
    %175 = vmatpush.msra.mxu0 0.0
    %176 = vmatpush.msra.mxu0 0.0
    %177 = vmatpush.msra.mxu0 0.0
    %178 = vmatpush.msra.mxu0 0.0
    %179 = vmatpush.msra.mxu0 0.0
    %180 = vmatpush.msra.mxu0 0.0
    %181 = vmatpush.msra.mxu0 0.0
    %182 = vmatpush.msra.mxu0 %v161
    %183 = vmatpush.msra.mxu0 %v160
    %184 = vmatpush.msra.mxu0 %v159
    %185 = vmatpush.msra.mxu0 %v158
    %186 = vmatmul.f32.gmra.mxu0 %v168
    %v187 = vpop.f32.mrf.mxu0
    %v188 = vadd.f32 %v164, %v187
    %189 = vdwg.mxu0
    %v190 = vmax.f32 %v188, 0.0
    %v191 = vld [vmem:[#allocation10] sm:$0xff]
    %v192 = vld [vmem:[#allocation10 + $0x8] sm:$0xff]
    %v193 = vld [vmem:[#allocation10 + $0x10] sm:$0xff]
    %v194 = vld [vmem:[#allocation10 + $0x18] sm:$0xff]
    %v195 = vld [vmem:[#allocation10 + $0x20] sm:$0xff]
    %v196 = vld [vmem:[#allocation10 + $0x28] sm:$0xff]
    %v197 = vld [vmem:[#allocation10 + $0x30] sm:$0xff]
    %v198 = vld [vmem:[#allocation10 + $0x38] sm:$0xff]
    %v199 = vld [vmem:[%s6] sm:$0x3]
    %v201 = vperm.slane %v199, 0
    %v202 = vperm.slane %v199, 1
    %v206 = vsel %vm166, %v190, 0
    %208 = vmatpush.msra.mxu0 0.0
    %209 = vmatpush.msra.mxu0 0.0
    %210 = vmatpush.msra.mxu0 0.0
    %211 = vmatpush.msra.mxu0 0.0
    %212 = vmatpush.msra.mxu0 0.0
    %213 = vmatpush.msra.mxu0 0.0
    %214 = vmatpush.msra.mxu0 0.0
    %215 = vmatpush.msra.mxu0 0.0
    %216 = vmatpush.msra.mxu0 0.0
    %217 = vmatpush.msra.mxu0 0.0
    %218 = vmatpush.msra.mxu0 0.0
    %219 = vmatpush.msra.mxu0 0.0
    %220 = vmatpush.msra.mxu0 %v197
    %221 = vmatpush.msra.mxu0 %v195
    %222 = vmatpush.msra.mxu0 %v193
    %223 = vmatpush.msra.mxu0 %v191
    %224 = vmatmul.f32.gmra.mxu0 %v206
    %v225 = vpop.f32.mrf.mxu0
    %v226 = vadd.f32 %v201, %v225
    %227 = vdwg.mxu0
    %228 = vmatpush.msra.mxu0 0.0
    %229 = vmatpush.msra.mxu0 0.0
    %230 = vmatpush.msra.mxu0 0.0
    %231 = vmatpush.msra.mxu0 0.0
    %232 = vmatpush.msra.mxu0 0.0
    %233 = vmatpush.msra.mxu0 0.0
    %234 = vmatpush.msra.mxu0 0.0
    %235 = vmatpush.msra.mxu0 0.0
    %236 = vmatpush.msra.mxu0 0.0
    %237 = vmatpush.msra.mxu0 0.0
    %238 = vmatpush.msra.mxu0 0.0
    %239 = vmatpush.msra.mxu0 0.0
    %240 = vmatpush.msra.mxu0 %v198
    %241 = vmatpush.msra.mxu0 %v196
    %242 = vmatpush.msra.mxu0 %v194
    %243 = vmatpush.msra.mxu0 %v192
    %244 = vmatmul.f32.gmra.mxu0 %v206
    %v245 = vpop.f32.mrf.mxu0
    %v246 = vadd.f32 %v202, %v245
    %247 = vdwg.mxu0
    %v248 = vlaneseq
    %v249 = vand.u32 %v248, 127
    %v250 = vand.u32 2147483647, %v226
    %v251 = vsub.f32 0.0, %v250
    %v252 = vmul.f32 %v251, 1.442695
    %v253 = vpow.pop %v252
    %vm254 = vcmp.ge.f32.partialorder %v226, 0.0
    %v255 = vadd.f32 %v253, 1.0
    %v256 = vrcp.pop %v255
    %v257 = vmul.f32 %v255, %v256
    %v258 = vsub.f32 1.0, %v257
    %v259 = vmul.f32 %v256, %v258
    %v260 = vadd.f32 %v256, %v259
    %vm261 = vweird.f32 %v255
    %vm262 = vweird.f32 %v256
    %vm263 = vmor %vm261, %vm262
    %v264 = vsel %vm263, %v256, %v260
    %v265 = vand.u32 2147483647, %v255
    %vm266 = vcmp.eq.f32.partialorder %v265, 8.507059e+37
    %v267 = vand.u32 %v255, 2147483648
    %v268 = vor.u32 1.1754944e-38, %v267
    %v269 = vsel %vm266, %v268, %v264
    %v270 = vmul.f32 1.0, %v269
    %v271 = vmul.f32 %v253, %v269
    %v272 = vsel %vm254, %v270, %v271
    %v273 = vmax.f32 %v226, 0.0
    %v274 = vadd.f32 %v253, 1.0
    %v275 = vlog2.pop %v274
    %v276 = vmul.f32 %v275, 0.6931472
    %v277 = vmul.f32 -0.5, %v253
    %v278 = vadd.f32 %v277, 1.0
    %v279 = vmul.f32 %v278, %v253
    %v280 = vand.u32 2147483647, %v253
    %vm281 = vcmp.lt.f32.partialorder %v280, 0.0004427343
    %v282 = vsel %vm281, %v279, %v276
    %v283 = vadd.f32 %v273, %v282
    %vm284 = vcmp.eq.s32.totalorder %v249, 3
    %vm285 = vcmp.eq.s32.totalorder %v249, 5
    %vm286 = vmor %vm284, %vm285
    %v287 = vsel %vm286, %v272, %v226
    %vm288 = vcmp.eq.s32.totalorder %v249, 4
    %v289 = vsel %vm288, %v283, %v287
    %290 = vst [vmem:[#allocation13] sm:$0xff] %v289
    %v291 = vmax.f32 %v246, 0.0
    %v292 = vld [vmem:[#allocation11] sm:$0xff]
    %v293 = vld [vmem:[#allocation11 + $0x8] sm:$0xff]
    %v294 = vld [vmem:[#allocation11 + $0x10] sm:$0xff]
    %v295 = vld [vmem:[#allocation11 + $0x18] sm:$0xff]
    %v296 = vld [vmem:[%s8] sm:$0x1]
    %v298 = vperm.slane %v296, 0
    %v301 = vsel %vm166, %v291, 0
    %303 = vmatpush.msra.mxu0 0.0
    %304 = vmatpush.msra.mxu0 0.0
    %305 = vmatpush.msra.mxu0 0.0
    %306 = vmatpush.msra.mxu0 0.0
    %307 = vmatpush.msra.mxu0 0.0
    %308 = vmatpush.msra.mxu0 0.0
    %309 = vmatpush.msra.mxu0 0.0
    %310 = vmatpush.msra.mxu0 0.0
    %311 = vmatpush.msra.mxu0 0.0
    %312 = vmatpush.msra.mxu0 0.0
    %313 = vmatpush.msra.mxu0 0.0
    %314 = vmatpush.msra.mxu0 0.0
    %315 = vmatpush.msra.mxu0 %v295
    %316 = vmatpush.msra.mxu0 %v294
    %317 = vmatpush.msra.mxu0 %v293
    %318 = vmatpush.msra.mxu0 %v292
    %319 = vmatmul.f32.gmra.mxu0 %v301
    %v320 = vpop.f32.mrf.mxu0
    %v321 = vadd.f32 %v298, %v320
    %322 = vdwg.mxu0
    %323 = vst [vmem:[#allocation14] sm:$0xff] %v321
    // Predicated region
    $region62: #{tpu_custom_call.1} parent=1 // pred_check
      _
    $region63: #{tpu_custom_call.1} parent=1 // pred_check_branch
      %325 = sbr.rel (0) target = $region65
    $region64: #{tpu_custom_call.1} parent=1 // pred_region
      %327 = vsyncadd [#allocation4], 0
      %s329 = sshll.u32 [#allocation13], 4
      %s330 = int_to_ptr.vmem [resolvable:$true] %s329
      %s331 = sshll.u32 %s9, 4
      %s332 = int_to_ptr.hbm [resolvable:$true] %s331
      %334 = dma.vmem_to_hbm [thread:$0]  %s330, 128, %s332, [#allocation4]
    $region65: #{tpu_custom_call.1} parent=1 // pred_fallthru
      _
    // Predicated region
    $region66: #{tpu_custom_call.1} parent=1 // pred_check
      _
    $region67: #{tpu_custom_call.1} parent=1 // pred_check_branch
      %336 = sbr.rel (0) target = $region69
    $region68: #{tpu_custom_call.1} parent=1 // pred_region
      %338 = vsyncadd [#allocation15], 0
      %s340 = sshll.u32 [#allocation14], 4
      %s341 = int_to_ptr.vmem [resolvable:$true] %s340
      %s342 = sshll.u32 %s10, 4
      %s343 = int_to_ptr.hbm [resolvable:$true] %s342
      %345 = dma.vmem_to_hbm [thread:$0]  %s341, 128, %s343, [#allocation15]
    $region69: #{tpu_custom_call.1} parent=1 // pred_fallthru
      _
    // Predicated region
    $region70: #{tpu_custom_call.1} parent=1 // pred_check
      _
    $region71: #{tpu_custom_call.1} parent=1 // pred_check_branch
      %347 = sbr.rel (0) target = $region73
    $region72: #{tpu_custom_call.1} parent=1 // pred_region
      %349 = dma.done [#allocation4], 128
    $region73: #{tpu_custom_call.1} parent=1 // pred_fallthru
      _
    // Predicated region
    $region74: #{tpu_custom_call.1} parent=1 // pred_check
      _
    $region75: #{tpu_custom_call.1} parent=1 // pred_check_branch
      %351 = sbr.rel (0) target = $region77
    $region76: #{tpu_custom_call.1} parent=1 // pred_region
      %353 = dma.done [#allocation15], 128
    $region77: #{tpu_custom_call.1} parent=1 // pred_fallthru
      _
    %354 = vsyncpa [#allocation3], 1
    %355 = vsyncpa [#allocation6], 1
    %356 = vsyncpa [#allocation9], 1
    %357 = vsyncpa [#allocation12], 1
    %358 = vsyncpa [#allocation4], 1
    %359 = vsyncpa [#allocation15], 1

</llo_original>
